<compile_context>
chip_gen: v6e
topology: v6e:2x2x1
jax: 0.10.0
libtpu: 0.0.40
codegen_flags: <defaults>
</compile_context>

<pallas_src>
import jax
import jax.numpy as jnp
from jax.experimental import pallas as pl
from jax.experimental.pallas import tpu as pltpu


def _cdiv(a, b):
    return -(-a // b)


def _make_bce_kernel(np_half, np_tiles, full_tiles, rem, nsplit):
    """Streaming BCE row-sum kernel over a (split, batch-tile, pixel-tile) grid."""
    # Static flag: do we ever see a ragged or fully-out-of-range pixel tile?
    needs_guard = (rem != 0) or (nsplit * np_half != np_tiles)

    def kernel(rx1_ref, x1_ref, rx2_ref, x2_ref, out_ref, acc_ref):
        c = pl.program_id(0)           # pixel-split index (parallel)
        p = pl.program_id(2)           # pixel-tile index within this split (arbitrary)
        t = c * np_half + p            # global pixel-tile index

        @pl.when(p == 0)
        def _init():
            acc_ref[...] = jnp.zeros_like(acc_ref)

        def tile_bce():
            def bce(rx_ref, x_ref):
                rx = rx_ref[...].astype(jnp.float32)
                x = x_ref[...].astype(jnp.float32)
                # Matches PyTorch binary_cross_entropy (log terms clamped at -100):
                #   -(x*l1 + (1-x)*l2) == -(l2 + x*(l1 - l2))
                l1 = jnp.maximum(jnp.log(rx), -100.0)
                l2 = jnp.maximum(jnp.log(1.0 - rx), -100.0)
                return -(l2 + x * (l1 - l2))
            return bce(rx1_ref, x1_ref) + bce(rx2_ref, x2_ref)

        if not needs_guard:
            # Every tile is full and in range: pure VPU per-lane accumulation.
            acc_ref[...] += tile_bce()
        else:
            @pl.when(t < full_tiles)
            def _full_tile():
                acc_ref[...] += tile_bce()

            if rem > 0:
                @pl.when(t == full_tiles)
                def _ragged_tile():
                    # Last (partial) pixel tile: mask the OOB columns in-kernel
                    # (no HBM padding copy). Garbage in masked lanes may be
                    # NaN/inf — select drops it.
                    col = jax.lax.broadcasted_iota(jnp.int32, acc_ref.shape, 1)
                    acc_ref[...] += jnp.where(col < rem, tile_bce(), 0.0)
            # t > full_tiles (overhang tile of the 2-way split): skip entirely.

        @pl.when(p == np_half - 1)
        def _finalize():
            # Single cross-lane (XLU) reduction per (split, batch-tile).
            out_ref[...] = jnp.sum(acc_ref[...], axis=-1, keepdims=True)

    return kernel


def vae_loss_normal_contrastive(elem1, elem2, alpha=1.0, beta=1.0, gamma=10.0,
                                *, max_tp=65536, split_pixels=None):
    """elem1/elem2: dicts with 'mu','logvar' [B,Z] and 'recon_x','x' [B,C,H,W]."""
    B, C, H, W = elem1["x"].shape
    P = C * H * W

    # Flatten NCHW images to [B, C*H*W] (lane-dense last axis). BCE is
    # elementwise-then-summed, so the reference's NHWC permute is irrelevant.
    rx1 = elem1["recon_x"].reshape(B, P)
    x1 = elem1["x"].reshape(B, P)
    rx2 = elem2["recon_x"].reshape(B, P)
    x2 = elem2["x"].reshape(B, P)

    # ---- Batch tile -----------------------------------------------------------
    all_bf16 = all(a.dtype == jnp.bfloat16 for a in (rx1, x1, rx2, x2))
    if all_bf16 and B >= 16:
        TB = 16                       # native bf16 (16,128) sublane packing
    elif B >= 8:
        TB = 8
    else:
        TB = B                        # tiny batch: block == full batch dim
    nb = _cdiv(B, TB)                 # ragged last batch tile handled by Pallas
                                      # OOB-write masking (garbage rows dropped)

    # ---- Pixel tile -----------------------------------------------------------
    max_tp = max(128, (int(max_tp) // 128) * 128)
    if P <= max_tp:
        TP = P                        # single tile; block == full array dim
        np_tiles = 1
    else:
        TP = max_tp                   # multiple of 128
        np_tiles = _cdiv(P, TP)
    full_tiles = P // TP
    rem = P % TP

    # ---- Optional 2-way pixel split (v7x dual-TensorCore) ---------------------
    if split_pixels is None:
        # Free when np_tiles is even; when odd, the single overhang tile re-read
        # is <= 1/np_tiles extra HBM traffic, so only enable for >= 8 tiles.
        nsplit = 2 if (np_tiles >= 2 and (np_tiles % 2 == 0 or np_tiles >= 8)) else 1
    else:
        nsplit = 2 if (int(split_pixels) >= 2 and np_tiles >= 2) else 1
    np_half = _cdiv(np_tiles, nsplit)

    # ---- Specs ----------------------------------------------------------------
    def img_map(c, b, p):
        # Clamp the overhang tile (only exists for odd np_tiles with nsplit=2)
        # to the last valid tile; the kernel skips its accumulation.
        return (b, jnp.minimum(c * np_half + p, np_tiles - 1))

    img_spec = pl.BlockSpec((TB, TP), img_map)
    out_spec = pl.BlockSpec((None, TB, 1), lambda c, b, p: (c, b, 0))

    bytes_in = B * P * sum(jnp.dtype(a.dtype).itemsize for a in (rx1, x1, rx2, x2))
    cost = pl.CostEstimate(
        flops=int(16 * B * P),
        transcendentals=int(4 * B * P),
        bytes_accessed=int(bytes_in + nsplit * B * 4),
    )

    parts = pl.pallas_call(
        _make_bce_kernel(np_half, np_tiles, full_tiles, rem, nsplit),
        out_shape=jax.ShapeDtypeStruct((nsplit, B, 1), jnp.float32),
        grid_spec=pltpu.PrefetchScalarGridSpec(
            num_scalar_prefetch=0,
            grid=(nsplit, nb, np_half),
            in_specs=[img_spec, img_spec, img_spec, img_spec],
            out_specs=out_spec,
            scratch_shapes=[pltpu.VMEM((TB, TP), jnp.float32)],
        ),
        compiler_params=pltpu.CompilerParams(
            dimension_semantics=("parallel", "parallel", "arbitrary"),
            vmem_limit_bytes=48 * 1024 * 1024,
        ),
        cost_estimate=cost,
    )(rx1, x1, rx2, x2)

    # Per-row reconstruction loss (sum over both pairs and both pixel halves).
    recon = jnp.sum(parts[:, :, 0], axis=0)                      # (B,)

    # Tiny O(B*Z) latent terms + final mean in plain JAX.
    mu1 = elem1["mu"].astype(jnp.float32)
    lv1 = elem1["logvar"].astype(jnp.float32)
    mu2 = elem2["mu"].astype(jnp.float32)
    lv2 = elem2["logvar"].astype(jnp.float32)
    kld1 = -0.5 * jnp.sum(1.0 + lv1 - mu1 * mu1 - jnp.exp(lv1), axis=-1)
    kld2 = -0.5 * jnp.sum(1.0 + lv2 - mu2 * mu2 - jnp.exp(lv2), axis=-1)
    contr = jnp.sum((mu1 - mu2) ** 2 * 0.5, axis=-1)

    return jnp.mean(recon * alpha + (kld1 + kld2) * beta + contr * gamma)


def _reference(elem1, elem2, alpha=1.0, beta=1.0, gamma=10.0):
    def kld(mu, lv):
        mu = mu.astype(jnp.float32)
        lv = lv.astype(jnp.float32)
        return -0.5 * jnp.sum(1.0 + lv - mu * mu - jnp.exp(lv), axis=-1)

    def recon(rx, x):
        rx = rx.astype(jnp.float32)
        x = x.astype(jnp.float32)
        bce = -(x * jnp.maximum(jnp.log(rx), -100.0)
                + (1.0 - x) * jnp.maximum(jnp.log(1.0 - rx), -100.0))
        return jnp.sum(bce, axis=(-1, -2, -3))

    k1 = kld(elem1["mu"], elem1["logvar"])
    k2 = kld(elem2["mu"], elem2["logvar"])
    r1 = recon(elem1["recon_x"], elem1["x"])
    r2 = recon(elem2["recon_x"], elem2["x"])
    mu1 = elem1["mu"].astype(jnp.float32)
    mu2 = elem2["mu"].astype(jnp.float32)
    contr = jnp.sum((mu1 - mu2) ** 2 / 2.0, axis=-1)
    return jnp.mean((r1 + r2) * alpha + (k1 + k2) * beta + contr * gamma)


if __name__ == "__main__":
    key = jax.random.PRNGKey(0)

    def make_elem(k, B, C, H, W, Z, img_dtype=jnp.float32):
        k_mu, k_lv, k_rx, k_x = jax.random.split(k, 4)
        mu = jax.random.normal(k_mu, (B, Z), dtype=jnp.float32)
        logvar = 0.1 * jax.random.normal(k_lv, (B, Z), dtype=jnp.float32)
        # recon_x in (0,1) (as if from a sigmoid decoder); x in [eps, 1-eps].
        recon_x = jax.nn.sigmoid(
            jax.random.normal(k_rx, (B, C, H, W), dtype=jnp.float32)).astype(img_dtype)
        x = jax.random.uniform(k_x, (B, C, H, W), dtype=jnp.float32,
                               minval=1e-4, maxval=1.0 - 1e-4).astype(img_dtype)
        return {"mu": mu, "logvar": logvar, "recon_x": recon_x, "x": x}

    k1, k2, k3, k4, k5, k6 = jax.random.split(key, 6)

    # Test 1: default config — small f32 problem, single pixel tile, TB = B.
    e1 = make_elem(k1, 2, 4, 16, 16, 32)
    e2 = make_elem(k2, 2, 4, 16, 16, 32)
    loss = vae_loss_normal_contrastive(e1, e2, alpha=1.0, beta=1.0, gamma=10.0)
    loss = jax.block_until_ready(loss)
    ref = _reference(e1, e2, 1.0, 1.0, 10.0)
    assert jnp.allclose(loss, ref, rtol=2e-5, atol=1e-2), (loss, ref)

    # Test 2: ragged batch (B=10 -> TB=8), multiple pixel tiles with a ragged
    # last tile, forced 2-way pixel split with an overhang tile (P=765, TP=256).
    e1b = make_elem(k3, 10, 3, 15, 17, 16)
    e2b = make_elem(k4, 10, 3, 15, 17, 16)
    loss2 = vae_loss_normal_contrastive(e1b, e2b, alpha=0.5, beta=2.0, gamma=10.0,
                                        max_tp=256, split_pixels=2)
    loss2 = jax.block_until_ready(loss2)
    ref2 = _reference(e1b, e2b, 0.5, 2.0, 10.0)
    assert jnp.allclose(loss2, ref2, rtol=2e-5, atol=1e-2), (loss2, ref2)

    # Test 3: bf16 images with B=16 -> TB=16 sublane packing, ragged lane width.
    e1c = make_elem(k5, 16, 2, 8, 9, 8, img_dtype=jnp.bfloat16)
    e2c = make_elem(k6, 16, 2, 8, 9, 8, img_dtype=jnp.bfloat16)
    loss3 = vae_loss_normal_contrastive(e1c, e2c)
    loss3 = jax.block_until_ready(loss3)
    ref3 = _reference(e1c, e2c)
    assert jnp.allclose(loss3, ref3, rtol=2e-5, atol=1e-2), (loss3, ref3)

    print("KERNEL_OK")
</pallas_src>

<mosaic_0001>
module attributes {stable_mosaic.version = 11 : i64} {
  func.func @kernel(%arg0: i32, %arg1: i32, %arg2: i32, %arg3: memref<2x1024xf32, #tpu.memory_space<vmem>>, %arg4: memref<2x1024xf32, #tpu.memory_space<vmem>>, %arg5: memref<2x1024xf32, #tpu.memory_space<vmem>>, %arg6: memref<2x1024xf32, #tpu.memory_space<vmem>>, %arg7: memref<1x2x1xf32, #tpu.memory_space<vmem>>, %arg8: memref<2x1024xf32, #tpu.memory_space<vmem>>) attributes {dimension_semantics = [#tpu.dimension_semantics<parallel>, #tpu.dimension_semantics<parallel>, #tpu.dimension_semantics<arbitrary>], iteration_bounds = array<i64: 1, 1, 1>, scalar_prefetch = 0 : i64, scratch_operands = 1 : i64, tpu.core_type = #tpu.core_type<tc>, window_params = [{transform_indices = @transform_0, window_bounds = array<i64: 2, 1024>}, {transform_indices = @transform_1, window_bounds = array<i64: 2, 1024>}, {transform_indices = @transform_2, window_bounds = array<i64: 2, 1024>}, {transform_indices = @transform_3, window_bounds = array<i64: 2, 1024>}, {transform_indices = @transform_4, window_bounds = array<i64: 1, 2, 1>}]} {
    %c0_i32 = arith.constant 0 : i32
    %0 = arith.cmpi eq, %arg2, %c0_i32 : i32
    %1 = arith.extui %0 : i1 to i32
    %c0_i32_0 = arith.constant 0 : i32
    %2 = arith.cmpi ne, %1, %c0_i32_0 : i32
    scf.if %2 {
      %cst_21 = arith.constant 0.000000e+00 : f32
      %40 = vector.broadcast %cst_21 : f32 to vector<2x1024xf32>
      %c0_22 = arith.constant 0 : index
      %c0_23 = arith.constant 0 : index
      %41 = vector.load %arg8[%c0_22, %c0_23] : memref<2x1024xf32, #tpu.memory_space<vmem>>, vector<2x1024xf32>
      tpu.vector_store %arg8[%c0_22, %c0_23], %40 {strides = array<i32>} : memref<2x1024xf32, #tpu.memory_space<vmem>>, vector<2x1024xf32>,
    } else {
    }
    %c0 = arith.constant 0 : index
    %c0_1 = arith.constant 0 : index
    %3 = vector.load %arg8[%c0, %c0_1] : memref<2x1024xf32, #tpu.memory_space<vmem>>, vector<2x1024xf32>
    %c0_2 = arith.constant 0 : index
    %c0_3 = arith.constant 0 : index
    %4 = vector.load %arg3[%c0_2, %c0_3] : memref<2x1024xf32, #tpu.memory_space<vmem>>, vector<2x1024xf32>
    %c0_4 = arith.constant 0 : index
    %c0_5 = arith.constant 0 : index
    %5 = vector.load %arg4[%c0_4, %c0_5] : memref<2x1024xf32, #tpu.memory_space<vmem>>, vector<2x1024xf32>
    %6 = math.log %4 : vector<2x1024xf32>
    %cst = arith.constant -1.000000e+02 : f32
    %7 = vector.broadcast %cst : f32 to vector<2x1024xf32>
    %8 = arith.maximumf %6, %7 : vector<2x1024xf32>
    %cst_6 = arith.constant 1.000000e+00 : f32
    %9 = vector.broadcast %cst_6 : f32 to vector<2x1024xf32>
    %10 = arith.subf %9, %4 : vector<2x1024xf32>
    %11 = math.log %10 : vector<2x1024xf32>
    %cst_7 = arith.constant -1.000000e+02 : f32
    %12 = vector.broadcast %cst_7 : f32 to vector<2x1024xf32>
    %13 = arith.maximumf %11, %12 : vector<2x1024xf32>
    %14 = arith.subf %8, %13 : vector<2x1024xf32>
    %15 = arith.mulf %5, %14 : vector<2x1024xf32>
    %16 = arith.addf %13, %15 : vector<2x1024xf32>
    %cst_8 = arith.constant 0.000000e+00 : f32
    %17 = vector.broadcast %cst_8 : f32 to vector<2x1024xf32>
    %18 = arith.subf %17, %16 : vector<2x1024xf32>
    %c0_9 = arith.constant 0 : index
    %c0_10 = arith.constant 0 : index
    %19 = vector.load %arg5[%c0_9, %c0_10] : memref<2x1024xf32, #tpu.memory_space<vmem>>, vector<2x1024xf32>
    %c0_11 = arith.constant 0 : index
    %c0_12 = arith.constant 0 : index
    %20 = vector.load %arg6[%c0_11, %c0_12] : memref<2x1024xf32, #tpu.memory_space<vmem>>, vector<2x1024xf32>
    %21 = math.log %19 : vector<2x1024xf32>
    %cst_13 = arith.constant -1.000000e+02 : f32
    %22 = vector.broadcast %cst_13 : f32 to vector<2x1024xf32>
    %23 = arith.maximumf %21, %22 : vector<2x1024xf32>
    %cst_14 = arith.constant 1.000000e+00 : f32
    %24 = vector.broadcast %cst_14 : f32 to vector<2x1024xf32>
    %25 = arith.subf %24, %19 : vector<2x1024xf32>
    %26 = math.log %25 : vector<2x1024xf32>
    %cst_15 = arith.constant -1.000000e+02 : f32
    %27 = vector.broadcast %cst_15 : f32 to vector<2x1024xf32>
    %28 = arith.maximumf %26, %27 : vector<2x1024xf32>
    %29 = arith.subf %23, %28 : vector<2x1024xf32>
    %30 = arith.mulf %20, %29 : vector<2x1024xf32>
    %31 = arith.addf %28, %30 : vector<2x1024xf32>
    %cst_16 = arith.constant 0.000000e+00 : f32
    %32 = vector.broadcast %cst_16 : f32 to vector<2x1024xf32>
    %33 = arith.subf %32, %31 : vector<2x1024xf32>
    %34 = arith.addf %18, %33 : vector<2x1024xf32>
    %35 = arith.addf %3, %34 : vector<2x1024xf32>
    %c0_17 = arith.constant 0 : index
    %c0_18 = arith.constant 0 : index
    %36 = vector.load %arg8[%c0_17, %c0_18] : memref<2x1024xf32, #tpu.memory_space<vmem>>, vector<2x1024xf32>
    tpu.vector_store %arg8[%c0_17, %c0_18], %35 {strides = array<i32>} : memref<2x1024xf32, #tpu.memory_space<vmem>>, vector<2x1024xf32>,
    %c0_i32_19 = arith.constant 0 : i32
    %37 = arith.cmpi eq, %arg2, %c0_i32_19 : i32
    %38 = arith.extui %37 : i1 to i32
    %c0_i32_20 = arith.constant 0 : i32
    %39 = arith.cmpi ne, %38, %c0_i32_20 : i32
    scf.if %39 {
      %c0_21 = arith.constant 0 : index
      %c0_22 = arith.constant 0 : index
      %40 = vector.load %arg8[%c0_21, %c0_22] : memref<2x1024xf32, #tpu.memory_space<vmem>>, vector<2x1024xf32>
      %cst_23 = arith.constant dense<0.000000e+00> : vector<2xf32>
      %41 = vector.multi_reduction <add>, %40, %cst_23 [1] : vector<2x1024xf32> to vector<2xf32>
      %42 = vector.shape_cast %41 : vector<2xf32> to vector<2x1xf32>
      %c0_24 = arith.constant 0 : index
      %c0_25 = arith.constant 0 : index
      %c0_26 = arith.constant 0 : index
      %43 = vector.load %arg7[%c0_24, %c0_25, %c0_26] : memref<1x2x1xf32, #tpu.memory_space<vmem>>, vector<1x2x1xf32>
      %44 = vector.shape_cast %43 : vector<1x2x1xf32> to vector<2x1xf32>
      %45 = vector.shape_cast %42 : vector<2x1xf32> to vector<1x2x1xf32>
      tpu.vector_store %arg7[%c0_24, %c0_25, %c0_26], %45 {strides = array<i32>} : memref<1x2x1xf32, #tpu.memory_space<vmem>>, vector<1x2x1xf32>,
    } else {
    }
    return
  }
  func.func @transform_0(%arg0: i32, %arg1: i32, %arg2: i32) -> (i32, i32) {
    %c1_i32 = arith.constant 1 : i32
    %0 = arith.muli %arg0, %c1_i32 : i32
    %1 = arith.addi %0, %arg2 : i32
    %c0_i32 = arith.constant 0 : i32
    %2 = arith.minsi %1, %c0_i32 : i32
    %c0_i32_0 = arith.constant 0 : i32
    return %arg1, %2 : i32, i32
  }
  func.func @transform_1(%arg0: i32, %arg1: i32, %arg2: i32) -> (i32, i32) {
    %c1_i32 = arith.constant 1 : i32
    %0 = arith.muli %arg0, %c1_i32 : i32
    %1 = arith.addi %0, %arg2 : i32
    %c0_i32 = arith.constant 0 : i32
    %2 = arith.minsi %1, %c0_i32 : i32
    %c0_i32_0 = arith.constant 0 : i32
    return %arg1, %2 : i32, i32
  }
  func.func @transform_2(%arg0: i32, %arg1: i32, %arg2: i32) -> (i32, i32) {
    %c1_i32 = arith.constant 1 : i32
    %0 = arith.muli %arg0, %c1_i32 : i32
    %1 = arith.addi %0, %arg2 : i32
    %c0_i32 = arith.constant 0 : i32
    %2 = arith.minsi %1, %c0_i32 : i32
    %c0_i32_0 = arith.constant 0 : i32
    return %arg1, %2 : i32, i32
  }
  func.func @transform_3(%arg0: i32, %arg1: i32, %arg2: i32) -> (i32, i32) {
    %c1_i32 = arith.constant 1 : i32
    %0 = arith.muli %arg0, %c1_i32 : i32
    %1 = arith.addi %0, %arg2 : i32
    %c0_i32 = arith.constant 0 : i32
    %2 = arith.minsi %1, %c0_i32 : i32
    %c0_i32_0 = arith.constant 0 : i32
    return %arg1, %2 : i32, i32
  }
  func.func @transform_4(%arg0: i32, %arg1: i32, %arg2: i32) -> (i32, i32, i32) {
    %c0_i32 = arith.constant 0 : i32
    %c0_i32_0 = arith.constant 0 : i32
    return %arg0, %arg1, %c0_i32 : i32, i32, i32
  }
}

</mosaic_0001>

<llo_original>
// kernel: tpu_custom_call.1
$region0: #{tpu_custom_call.1}
  #allocation0 [shape = 'u32[]', space=smem, size = 0x4, offset = 0x4, fixed_abs, tag = 'smem constant byte address 0x4 - core index']
  #allocation1 [shape = 'u32[144,128]{1,0:T(1,128)}', space=vmem, size = 0x12000, scoped, tag = 'internal scratch']
  #allocation2 [shape = 'f32[2,1024]{1,0:T(2,128)}', space=vmem, size = 0x2000, scoped, tag = 'scratch operand']
  %s0 = inlined_call_operand.hbm [shape: f32[2,1024], index: 0, kind: input, shape index: {}]
  %s1 = inlined_call_operand.hbm [shape: f32[2,1024], index: 1, kind: input, shape index: {}]
  %s2 = inlined_call_operand.hbm [shape: f32[2,1024], index: 2, kind: input, shape index: {}]
  %s3 = inlined_call_operand.hbm [shape: f32[2,1024], index: 3, kind: input, shape index: {}]
  %s4 = inlined_call_operand.vmem [shape: f32[1,2,1], index: 4, kind: output, shape index: {}]
  %s5 = sld [smem:[#allocation0]]
  $region50: #{tpu_custom_call.1} parent=0
    _
  %s7 = ssub.s32 1, %s5
  %s8 = scalar_select 0, %s7, %s5
  $region1: #{tpu_custom_call.1} parent=0
    #allocation3 [shape = 'u8[8192]{0}', space=vmem, size = 0x2000, scoped, tag = 'input window, operand 0, single buffered']
    #allocation4 [shape = 's32[1]{0}', space=sflag, size = 0x4, scoped, tag = 'scoped memory for tpu_custom_call.1']
    #allocation5 [shape = 'u8[8192]{0}', space=vmem, size = 0x2000, scoped, tag = 'input window, operand 1, single buffered']
    #allocation6 [shape = 's32[1]{0}', space=sflag, size = 0x4, scoped, tag = 'scoped memory for tpu_custom_call.1']
    #allocation7 [shape = 'u8[8192]{0}', space=vmem, size = 0x2000, scoped, tag = 'input window, operand 2, single buffered']
    #allocation8 [shape = 'u8[8192]{0}', space=vmem, size = 0x2000, scoped, tag = 'input window, operand 3, single buffered']
    #allocation9 [shape = 's32[1]{0}', space=sflag, size = 0x4, scoped, tag = 'scoped memory for tpu_custom_call.1']
    %9 = vsyncpa [#allocation4], 0
    %10 = vsyncpa [#allocation6], 0
    %11 = vsyncpa [#allocation9], 0
    // Predicated region
    $region2: #{tpu_custom_call.1} parent=1 // pred_check
      _
    $region3: #{tpu_custom_call.1} parent=1 // pred_check_branch
      %13 = sbr.rel (0) target = $region5
    $region4: #{tpu_custom_call.1} parent=1 // pred_region
      %s14 = sadd.s32 0, 0
      %p15 = scmp.lt.s32.totalorder %s14, 0
      %s16 = scalar_select %p15, %s14, 0
      %s17 = smul.u32 8, %s16
      %s19 = ssub.s32 256, 256
      %20 = vsyncadd [#allocation4], %s19
      %s21 = smul.addr %s17, 32
      %s22 = scalar_lea.hbm %s0, %s21
      %s24 = sshll.u32 [#allocation3], 4
      %s25 = int_to_ptr.vmem [resolvable:$true] %s24
      %27 = dma.hbm_to_vmem [thread:$0]  %s22, 256, %s25, [#allocation4]
    $region5: #{tpu_custom_call.1} parent=1 // pred_fallthru
      _
    // Predicated region
    $region6: #{tpu_custom_call.1} parent=1 // pred_check
      _
    $region7: #{tpu_custom_call.1} parent=1 // pred_check_branch
      %29 = sbr.rel (0) target = $region9
    $region8: #{tpu_custom_call.1} parent=1 // pred_region
      %s30 = sadd.s32 0, 0
      %p31 = scmp.lt.s32.totalorder %s30, 0
      %s32 = scalar_select %p31, %s30, 0
      %s33 = smul.u32 8, %s32
      %s35 = ssub.s32 256, 256
      %36 = vsyncadd [#allocation6], %s35
      %s37 = smul.addr %s33, 32
      %s38 = scalar_lea.hbm %s1, %s37
      %s40 = sshll.u32 [#allocation5], 4
      %s41 = int_to_ptr.vmem [resolvable:$true] %s40
      %43 = dma.hbm_to_vmem [thread:$0]  %s38, 256, %s41, [#allocation6]
    $region9: #{tpu_custom_call.1} parent=1 // pred_fallthru
      _
    // Predicated region
    $region10: #{tpu_custom_call.1} parent=1 // pred_check
      _
    $region11: #{tpu_custom_call.1} parent=1 // pred_check_branch
      %45 = sbr.rel (0) target = $region13
    $region12: #{tpu_custom_call.1} parent=1 // pred_region
      %s46 = sadd.s32 0, 0
      %p47 = scmp.lt.s32.totalorder %s46, 0
      %s48 = scalar_select %p47, %s46, 0
      %s49 = smul.u32 8, %s48
      %s51 = ssub.s32 256, 256
      %52 = vsyncadd [#allocation6], %s51
      %s53 = smul.addr %s49, 32
      %s54 = scalar_lea.hbm %s2, %s53
      %s56 = sshll.u32 [#allocation7], 4
      %s57 = int_to_ptr.vmem [resolvable:$true] %s56
      %59 = dma.hbm_to_vmem [thread:$0]  %s54, 256, %s57, [#allocation6]
    $region13: #{tpu_custom_call.1} parent=1 // pred_fallthru
      _
    // Predicated region
    $region14: #{tpu_custom_call.1} parent=1 // pred_check
      _
    $region15: #{tpu_custom_call.1} parent=1 // pred_check_branch
      %61 = sbr.rel (0) target = $region17
    $region16: #{tpu_custom_call.1} parent=1 // pred_region
      %s62 = sadd.s32 0, 0
      %p63 = scmp.lt.s32.totalorder %s62, 0
      %s64 = scalar_select %p63, %s62, 0
      %s65 = smul.u32 8, %s64
      %s67 = ssub.s32 256, 256
      %68 = vsyncadd [#allocation9], %s67
      %s69 = smul.addr %s65, 32
      %s70 = scalar_lea.hbm %s3, %s69
      %s72 = sshll.u32 [#allocation8], 4
      %s73 = int_to_ptr.vmem [resolvable:$true] %s72
      %75 = dma.hbm_to_vmem [thread:$0]  %s70, 256, %s73, [#allocation9]
    $region17: #{tpu_custom_call.1} parent=1 // pred_fallthru
      _
    // Predicated region
    $region18: #{tpu_custom_call.1} parent=1 // pred_check
      _
    $region19: #{tpu_custom_call.1} parent=1 // pred_check_branch
      %77 = sbr.rel (0) target = $region21
    $region20: #{tpu_custom_call.1} parent=1 // pred_region
      %78 = dma.done [#allocation4], 256
    $region21: #{tpu_custom_call.1} parent=1 // pred_fallthru
      _
    // Predicated region
    $region22: #{tpu_custom_call.1} parent=1 // pred_check
      _
    $region23: #{tpu_custom_call.1} parent=1 // pred_check_branch
      %80 = sbr.rel (0) target = $region25
    $region24: #{tpu_custom_call.1} parent=1 // pred_region
      %81 = dma.done [#allocation6], 256
    $region25: #{tpu_custom_call.1} parent=1 // pred_fallthru
      _
    // Predicated region
    $region26: #{tpu_custom_call.1} parent=1 // pred_check
      _
    $region27: #{tpu_custom_call.1} parent=1 // pred_check_branch
      %83 = sbr.rel (0) target = $region29
    $region28: #{tpu_custom_call.1} parent=1 // pred_region
      %84 = dma.done [#allocation6], 256
    $region29: #{tpu_custom_call.1} parent=1 // pred_fallthru
      _
    // Predicated region
    $region30: #{tpu_custom_call.1} parent=1 // pred_check
      _
    $region31: #{tpu_custom_call.1} parent=1 // pred_check_branch
      %86 = sbr.rel (0) target = $region33
    $region32: #{tpu_custom_call.1} parent=1 // pred_region
      %87 = dma.done [#allocation9], 256
    $region33: #{tpu_custom_call.1} parent=1 // pred_fallthru
      _
    %s88 = sadd.s32 0, 0
    %p89 = scmp.lt.s32.totalorder %s88, 0
    %s90 = scalar_select %p89, %s88, 0
    %s91 = smul.u32 8, %s90
    %s92 = sadd.s32 0, 0
    %p93 = scmp.lt.s32.totalorder %s92, 0
    %s94 = scalar_select %p93, %s92, 0
    %s95 = smul.u32 8, %s94
    %s96 = sadd.s32 0, 0
    %p97 = scmp.lt.s32.totalorder %s96, 0
    %s98 = scalar_select %p97, %s96, 0
    %s99 = smul.u32 8, %s98
    %s100 = sadd.s32 0, 0
    %p101 = scmp.lt.s32.totalorder %s100, 0
    %s102 = scalar_select %p101, %s100, 0
    %s103 = smul.u32 8, %s102
    %p104 = scmp.eq.s32.totalorder 0, 0
    // Predicated region
    $region34: #{tpu_custom_call.1} parent=1 // pred_check
      %p105 = pneg %p104
    $region35: #{tpu_custom_call.1} parent=1 // pred_check_branch
      %107 = sbr.rel (%p105) target = $region37
    $region36: #{tpu_custom_call.1} parent=1 // pred_region
      %108 = vst [vmem:[#allocation2] sm:$0xff] 0.0
      %109 = vst [vmem:[#allocation2 + $0x8] sm:$0xff] 0.0
    $region37: #{tpu_custom_call.1} parent=1 // pred_fallthru
      _
    %v110 = vld [vmem:[#allocation2] sm:$0xff]
    %v111 = vld [vmem:[#allocation2 + $0x8] sm:$0xff]
    %v112 = vld [vmem:[#allocation3] sm:$0xff]
    %v113 = vld [vmem:[#allocation3 + $0x8] sm:$0xff]
    %v114 = vld [vmem:[#allocation5] sm:$0xff]
    %v115 = vld [vmem:[#allocation5 + $0x8] sm:$0xff]
    %v116 = vlog2.pop %v112
    %v117 = vmul.f32 %v116, 0.6931472
    %v118 = vlog2.pop %v113
    %v119 = vmul.f32 %v118, 0.6931472
    %v120 = vmax.f32 %v117, -100.0
    %v121 = vmax.f32 %v119, -100.0
    %v122 = vsub.f32 1.0, %v112
    %v123 = vsub.f32 1.0, %v113
    %v124 = vlog2.pop %v122
    %v125 = vmul.f32 %v124, 0.6931472
    %v126 = vlog2.pop %v123
    %v127 = vmul.f32 %v126, 0.6931472
    %v128 = vmax.f32 %v125, -100.0
    %v129 = vmax.f32 %v127, -100.0
    %v130 = vsub.f32 %v120, %v128
    %v131 = vsub.f32 %v121, %v129
    %v132 = vmul.f32 %v114, %v130
    %v133 = vmul.f32 %v115, %v131
    %v134 = vadd.f32 %v128, %v132
    %v135 = vadd.f32 %v129, %v133
    %v136 = vsub.f32 0.0, %v134
    %v137 = vsub.f32 0.0, %v135
    %v138 = vld [vmem:[#allocation7] sm:$0xff]
    %v139 = vld [vmem:[#allocation7 + $0x8] sm:$0xff]
    %v140 = vld [vmem:[#allocation8] sm:$0xff]
    %v141 = vld [vmem:[#allocation8 + $0x8] sm:$0xff]
    %v142 = vlog2.pop %v138
    %v143 = vmul.f32 %v142, 0.6931472
    %v144 = vlog2.pop %v139
    %v145 = vmul.f32 %v144, 0.6931472
    %v146 = vmax.f32 %v143, -100.0
    %v147 = vmax.f32 %v145, -100.0
    %v148 = vsub.f32 1.0, %v138
    %v149 = vsub.f32 1.0, %v139
    %v150 = vlog2.pop %v148
    %v151 = vmul.f32 %v150, 0.6931472
    %v152 = vlog2.pop %v149
    %v153 = vmul.f32 %v152, 0.6931472
    %v154 = vmax.f32 %v151, -100.0
    %v155 = vmax.f32 %v153, -100.0
    %v156 = vsub.f32 %v146, %v154
    %v157 = vsub.f32 %v147, %v155
    %v158 = vmul.f32 %v140, %v156
    %v159 = vmul.f32 %v141, %v157
    %v160 = vadd.f32 %v154, %v158
    %v161 = vadd.f32 %v155, %v159
    %v162 = vsub.f32 0.0, %v160
    %v163 = vsub.f32 0.0, %v161
    %v164 = vadd.f32 %v136, %v162
    %v165 = vadd.f32 %v137, %v163
    %v166 = vadd.f32 %v110, %v164
    %v167 = vadd.f32 %v111, %v165
    %168 = vst [vmem:[#allocation2] sm:$0xff] %v166
    %169 = vst [vmem:[#allocation2 + $0x8] sm:$0xff] %v167
    // Predicated region
    $region38: #{tpu_custom_call.1} parent=1 // pred_check
      %p170 = pneg %p104
    $region39: #{tpu_custom_call.1} parent=1 // pred_check_branch
      %172 = sbr.rel (%p170) target = $region41
    $region40: #{tpu_custom_call.1} parent=1 // pred_region
      %v173 = vld [vmem:[#allocation2] sm:$0xff]
      %v174 = vld [vmem:[#allocation2 + $0x8] sm:$0xff]
      %v177 = vcombine.high %v173, %v173
      %v179 = vunpack.c.l.s4 1983009808
      %v180 = vunpack.c.0.s8 %v179
      %v181 = vlaneseq
      %v182 = vshrl.u32 %v181, 7
      %v183 = vsub.s32 %v180, %v182
      %v184 = vrot.slane %v173, %v183
      %v186 = vunpack.c.l.s4 1983009808
      %v187 = vunpack.c.0.s8 %v186
      %v188 = vlaneseq
      %v189 = vshrl.u32 %v188, 7
      %v190 = vsub.s32 %v187, %v189
      %v191 = vrot.slane %v177, %v190
      %v192 = vcombine.high %v184, %v184
      %v193 = vcombine.high %v191, %v191
      %v194 = vcombine.high %v174, %v174
      %v196 = vunpack.c.l.s4 1983009808
      %v197 = vunpack.c.0.s8 %v196
      %v198 = vlaneseq
      %v199 = vshrl.u32 %v198, 7
      %v200 = vsub.s32 %v197, %v199
      %v201 = vrot.slane %v174, %v200
      %v203 = vunpack.c.l.s4 1983009808
      %v204 = vunpack.c.0.s8 %v203
      %v205 = vlaneseq
      %v206 = vshrl.u32 %v205, 7
      %v207 = vsub.s32 %v204, %v206
      %v208 = vrot.slane %v194, %v207
      %v209 = vcombine.high %v201, %v201
      %v210 = vcombine.high %v208, %v208
      %vm219 = vcmask 1041408
      %v220 = vsel %vm219, %v184, 0.0
      %v221 = vsel %vm219, %v192, 0.0
      %v222 = vadd.f32 %v220, %v221
      %v223 = vsel %vm219, %v191, 0.0
      %v224 = vadd.f32 %v222, %v223
      %v225 = vsel %vm219, %v193, 0.0
      %v226 = vadd.f32 %v224, %v225
      %v227 = vsel %vm219, %v201, 0.0
      %v228 = vadd.f32 %v226, %v227
      %v229 = vsel %vm219, %v209, 0.0
      %v230 = vadd.f32 %v228, %v229
      %v231 = vsel %vm219, %v208, 0.0
      %v232 = vadd.f32 %v230, %v231
      %v233 = vsel %vm219, %v210, 0.0
      %v234 = vadd.f32 %v232, %v233
      %235 = vadd.xlane.f32.xlu0 %v234
      %v236 = vpop.xlane.xlu0 %235
      %vm237 = vcmask 1024
      %238 = vst.msk [vmem:[%s4] sm:$0x3] %vm237, %v236
    $region41: #{tpu_custom_call.1} parent=1 // pred_fallthru
      _
    // Predicated region
    $region42: #{tpu_custom_call.1} parent=1 // pred_check
      _
    $region43: #{tpu_custom_call.1} parent=1 // pred_check_branch
      %240 = sbr.rel (0) target = $region45
    $region44: #{tpu_custom_call.1} parent=1 // pred_region
      _
    $region45: #{tpu_custom_call.1} parent=1 // pred_fallthru
      _
    // Predicated region
    $region46: #{tpu_custom_call.1} parent=1 // pred_check
      _
    $region47: #{tpu_custom_call.1} parent=1 // pred_check_branch
      %242 = sbr.rel (0) target = $region49
    $region48: #{tpu_custom_call.1} parent=1 // pred_region
      _
    $region49: #{tpu_custom_call.1} parent=1 // pred_fallthru
      _
    %243 = vsyncpa [#allocation4], 1
    %244 = vsyncpa [#allocation6], 1
    %245 = vsyncpa [#allocation9], 1

</llo_original>
